<compile_context>
chip_gen: v6e
topology: v6e:2x2x1
jax: 0.10.0
libtpu: 0.0.40
codegen_flags: <defaults>
</compile_context>

<pallas_src>
import functools

import jax
import jax.numpy as jnp
from jax import lax
from jax.experimental import pallas as pl
from jax.experimental.pallas import tpu as pltpu

_VMEM_SPEC = pl.BlockSpec(memory_space=pltpu.MemorySpace.VMEM)


# ---------------------------------------------------------------------------
# Fused kernel: the full maxiters gradient-descent loop, batch folded in
# ---------------------------------------------------------------------------
def _seis_gd_fused_kernel(x0_ref, y_ref, at_ref, as_ref, yl1_ref, masks_ref,
                          w1_ref, w2_ref, w3_ref, b2_ref, b3_ref,
                          o_ref, tap_ref, *, maxiters, shifts, rows_x, rows_h):
    """Single program, batch folded into sublanes, N = H*W on the lane axis:

      x0    : (RX, N)  f32   initial xk rows, RX = B*C  (row = b*C + c)
      y     : (RX, N)  f32   flattened measurements
      at    : (N, N)   bf16  A^T
      as_   : (N, N)   bf16  s * A                     (step folded in)
      yl1   : (RH, N)  f32   y-half of DnCNN layer 1 + b1, RH = B*F
      masks : (9, 1, N) f32  3x3-tap zero-padding masks over the flat image
      w1    : (RH, 9*RX) bf16  layer-1 x-half weights, tap-stacked, blockdiag(B)
      w2    : (RH, 9*RH) bf16  layer-2 weights, tap-stacked, blockdiag(B)
      w3    : (RX, 9*RH) bf16  s * layer-3 weights, tap-stacked, blockdiag(B)
      b2    : (RH, N)  f32   layer-2 bias, lane-dense
      b3    : (RX, N)  f32   s * layer-3 bias, lane-dense
      o     : (RX, N)  f32   xk after maxiters iterations
      tap   : (9*RH, N) f32  VMEM scratch for the stacked conv taps
    """
    f32, bf16 = jnp.float32, jnp.bfloat16
    masks = masks_ref[...]                  # hoisted: constant across the loop

    def conv3x3(h, w_ref, rows):
        # 3x3 'same' conv: lane roll + boundary mask per tap, taps stacked into
        # the scratch, then ONE (rows_out, 9*rows) @ (9*rows, N) MXU dot.
        for t, sh in enumerate(shifts):
            tap = h if sh == 0 else pltpu.roll(h, sh, 1) * masks[t]
            tap_ref[t * rows:(t + 1) * rows, :] = tap
        stk = tap_ref[0:9 * rows, :].astype(bf16)
        return jnp.dot(w_ref[...], stk, preferred_element_type=f32)

    def one_iter(_, x):
        # s * R(y, x): reduced DnCNN on the folded batch (uses the OLD x)
        h1 = jnp.maximum(yl1_ref[...] + conv3x3(x, w1_ref, rows_x), 0.0)
        h2 = jnp.maximum(conv3x3(h1, w2_ref, rows_h) + b2_ref[...], 0.0)
        r_s = conv3x3(h2, w3_ref, rows_h) + b3_ref[...]
        # s * gradient = (x @ A^T - y) @ (s*A); A-resident, bf16 MXU / f32 acc.
        t = jnp.dot(x.astype(bf16), at_ref[...], preferred_element_type=f32)
        d_s = jnp.dot((t - y_ref[...]).astype(bf16), as_ref[...],
                      preferred_element_type=f32)
        return x - d_s - r_s

    # maxiters is small; full unroll keeps LLO scheduling visibility.
    # (For maxiters >~ 8 switch to a bounded unroll factor, e.g. unroll=2.)
    o_ref[...] = lax.fori_loop(0, maxiters, one_iter, x0_ref[...], unroll=True)


# ---------------------------------------------------------------------------
# Tiny probe: determine pltpu.roll direction once so the shift table is exact
# ---------------------------------------------------------------------------
def _roll_matches_jnp_roll():
    def _probe(x_ref, o_ref):
        o_ref[...] = pltpu.roll(x_ref[...], 1, 1)

    x = jnp.broadcast_to(jnp.arange(128, dtype=jnp.float32), (8, 128))
    out = pl.pallas_call(
        _probe,
        out_shape=jax.ShapeDtypeStruct((8, 128), jnp.float32),
        in_specs=[_VMEM_SPEC],
        out_specs=_VMEM_SPEC,
    )(x)
    # jnp.roll semantics: out[0] == x[-1] == 127
    return bool(out[0, 0] == 127.0)


# ---------------------------------------------------------------------------
# Wrapper: loop-invariant precompute in XLA, then one fused pallas_call
# ---------------------------------------------------------------------------
def seis_gd_forward(xk, y, a_mat, eta, dncnn_params, *, maxiters,
                    roll_matches_jnp=True):
    """seis_gd.forward with sigma == 0 (eval / non-jitter path)."""
    # TODO(synk): the 'sgd-jitter' training branch (torch.randn_like noise
    # injection) is not implemented; only the sigma == 0 path is reproduced.
    B, C, H, W = xk.shape
    N = H * W
    f32, bf16 = jnp.float32, jnp.bfloat16
    F = dncnn_params["w1"].shape[-1]
    RX, RH = B * C, B * F                      # folded-batch row counts

    s = (0.1 * jax.nn.sigmoid(eta)).reshape(()).astype(f32)
    a = a_mat.astype(f32)

    # ---- A-resident gradient operands (no O(N^3) gramian precompute) ----
    a_t = a.T.astype(bf16)                     # (N, N)  A^T
    a_s = (s * a).astype(bf16)                 # (N, N)  s*A (step folded in)

    # ---- 3x3 tap geometry: lane-roll shifts + zero-pad boundary masks ----
    ii = jnp.arange(N) // W
    jj = jnp.arange(N) % W
    masks_list, shifts = [], []
    for dy in range(3):
        for dx in range(3):
            s_geom = (dy - 1) * W + (dx - 1)   # flat neighbor offset
            shifts.append(((-s_geom) if roll_matches_jnp else s_geom) % N)
            valid = ((ii + dy - 1 >= 0) & (ii + dy - 1 < H) &
                     (jj + dx - 1 >= 0) & (jj + dx - 1 < W))
            masks_list.append(valid)
    masks = jnp.stack(masks_list).astype(f32)[:, None, :]      # (9, 1, N)
    shifts = tuple(int(v) for v in shifts)

    # ---- DnCNN params ----
    w1 = dncnn_params["w1"].astype(f32)        # (9, 2C, F), channels = [y | x]
    b1 = dncnn_params["b1"].astype(f32).reshape(F)
    w2 = dncnn_params["w2"].astype(f32)        # (9, F, F)
    b2 = dncnn_params["b2"].astype(f32).reshape(F)
    w3 = dncnn_params["w3"].astype(f32)        # (9, F, C)
    b3 = dncnn_params["b3"].astype(f32).reshape(C)

    # Hoist loop-invariant y-half of layer 1 (+ bias b1), folded to (RH, N).
    yf = y.astype(f32)
    yp = jnp.pad(yf, ((0, 0), (0, 0), (1, 1), (1, 1)))
    ytaps = jnp.stack([yp[:, :, dy:dy + H, dx:dx + W].reshape(B, C, N)
                       for dy in range(3) for dx in range(3)], axis=0)  # (9,B,C,N)
    y_l1 = (jnp.einsum("tcf,tbcn->bfn", w1[:, :C, :], ytaps)
            + b1[None, :, None]).reshape(RH, N)                         # (RH, N)

    # Tap-stacked, batch-block-diagonal conv weights: one matmul per layer.
    eye_b = jnp.eye(B, dtype=f32)

    def stack_taps(w_t):                       # (9, cin, cout) -> (B*cout, 9*B*cin)
        return jnp.concatenate(
            [jnp.kron(eye_b, w_t[t].T) for t in range(9)], axis=1)

    w1x_stk = stack_taps(w1[:, C:, :]).astype(bf16)   # (RH, 9*RX)
    w2_stk = stack_taps(w2).astype(bf16)              # (RH, 9*RH)
    w3s_stk = stack_taps(s * w3).astype(bf16)         # (RX, 9*RH), step folded in

    # Lane-dense bias maps (no in-kernel lane-broadcast adds).
    b2_map = jnp.broadcast_to(jnp.tile(b2, B)[:, None], (RH, N)).astype(f32)
    b3s_map = jnp.broadcast_to(jnp.tile(s * b3, B)[:, None], (RX, N)).astype(f32)

    x0 = xk.reshape(RX, N).astype(f32)
    yflat = yf.reshape(RX, N)

    kernel = functools.partial(_seis_gd_fused_kernel, maxiters=maxiters,
                               shifts=shifts, rows_x=RX, rows_h=RH)

    flops_per_iter = (4 * RX * N * N                    # two (RX,N)@(N,N) matmuls
                      + 2 * RH * (9 * RX) * N           # conv layer 1 (x half)
                      + 2 * RH * (9 * RH) * N           # conv layer 2
                      + 2 * RX * (9 * RH) * N)          # conv layer 3
    bytes_accessed = (2 * N * N * 2                     # A^T, s*A (bf16)
                      + (3 * RX + 2 * RH) * N * 4       # x0, y, out, yl1, b2
                      + RX * N * 4 + 9 * N * 4          # b3 map, masks
                      + (RH * 9 * RX + RH * 9 * RH + RX * 9 * RH) * 2)
    cost = pl.CostEstimate(flops=maxiters * flops_per_iter,
                           transcendentals=0,
                           bytes_accessed=bytes_accessed)

    out = pl.pallas_call(
        kernel,
        out_shape=jax.ShapeDtypeStruct((RX, N), f32),
        in_specs=[_VMEM_SPEC] * 11,
        out_specs=_VMEM_SPEC,
        scratch_shapes=[pltpu.VMEM((9 * RH, N), f32)],   # stacked conv taps
        cost_estimate=cost,
    )(x0, yflat, a_t, a_s, y_l1, masks, w1x_stk, w2_stk, w3s_stk,
      b2_map, b3s_map)

    return out.reshape(B, C, H, W)


# ---------------------------------------------------------------------------
# Pure-XLA f32 reference (mirrors the PyTorch module with the synthetic ops)
# ---------------------------------------------------------------------------
def seis_gd_reference(xk, y, a_mat, eta, params, *, maxiters):
    B, C, H, W = xk.shape
    N = H * W
    s = (0.1 * jax.nn.sigmoid(eta)).reshape(())

    def conv3x3(x_nchw, w, b, relu):
        _, _, Hh, Ww = x_nchw.shape
        xp = jnp.pad(x_nchw, ((0, 0), (0, 0), (1, 1), (1, 1)))
        taps = jnp.stack([xp[:, :, dy:dy + Hh, dx:dx + Ww]
                          for dy in range(3) for dx in range(3)], 0)
        out = jnp.einsum("tcf,tbchw->bfhw", w, taps) + b[None, :, None, None]
        return jnp.maximum(out, 0.0) if relu else out

    w1, b1 = params["w1"], params["b1"].reshape(-1)
    w2, b2 = params["w2"], params["b2"].reshape(-1)
    w3, b3 = params["w3"], params["b3"].reshape(-1)

    y_flat = y.reshape(B * C, N)
    x = xk
    for _ in range(maxiters):
        h = conv3x3(jnp.concatenate([y, x], axis=1), w1, b1, True)
        h = conv3x3(h, w2, b2, True)
        r = conv3x3(h, w3, b3, False)
        xf = x.reshape(B * C, N)
        grad = (xf @ a_mat.T - y_flat) @ a_mat              # gramian(x) - adjoint(y)
        xf = xf - s * grad - s * r.reshape(B * C, N)
        x = xf.reshape(B, C, H, W)
    return x


# ---------------------------------------------------------------------------
# Driver
# ---------------------------------------------------------------------------
if __name__ == "__main__":
    key = jax.random.PRNGKey(0)
    B, C, H, W = 2, 4, 16, 16
    N = H * W
    F = 8              # DnCNN hidden channels
    MAXITERS = 3       # args.maxiters

    ks = jax.random.split(key, 8)
    xk = jax.random.normal(ks[0], (B, C, H, W), jnp.float32)
    y = jax.random.normal(ks[1], (B, C, H, W), jnp.float32)
    a_mat = jax.random.normal(ks[2], (N, N), jnp.float32) / jnp.sqrt(N)
    eta = jnp.ones((1,), jnp.float32)   # nn.Parameter(torch.ones(1) * args.eta)

    def conv_init(kw, cin, cout):
        kw1, kw2 = jax.random.split(kw)
        w = jax.random.normal(kw1, (3, 3, cin, cout), jnp.float32) * 0.05
        b = jax.random.normal(kw2, (cout,), jnp.float32) * 0.05
        return w.reshape(9, cin, cout), b

    w1, b1 = conv_init(ks[3], 2 * C, F)
    w2, b2 = conv_init(ks[4], F, F)
    w3, b3 = conv_init(ks[5], F, C)
    params = dict(w1=w1, b1=b1, w2=w2, b2=b2, w3=w3, b3=b3)

    # resolve pltpu.roll direction once, then bake the exact shift table in.
    roll_ok = _roll_matches_jnp_roll()

    fwd = jax.jit(functools.partial(seis_gd_forward, maxiters=MAXITERS,
                                    roll_matches_jnp=roll_ok))
    out = jax.block_until_ready(fwd(xk, y, a_mat, eta, params))

    ref = jax.block_until_ready(
        jax.jit(functools.partial(seis_gd_reference, maxiters=MAXITERS))(
            xk, y, a_mat, eta, params))

    assert out.shape == (B, C, H, W)
    assert bool(jnp.all(jnp.isfinite(out)))
    err = float(jnp.max(jnp.abs(out - ref)))
    # bf16 MXU operands (A^T, s*A, conv weight stacks) with f32 accumulation:
    # tolerance relaxed accordingly vs the pure-f32 reference.
    assert err < 1e-2, f"mismatch vs XLA reference: max abs err = {err}"
    print("KERNEL_OK")
</pallas_src>

<mosaic_0001>
module attributes {stable_mosaic.version = 11 : i64} {
  func.func @_probe(%arg0: memref<8x128xf32, #tpu.memory_space<vmem>>, %arg1: memref<8x128xf32, #tpu.memory_space<vmem>>) attributes {dimension_semantics = [], scalar_prefetch = 0 : i64, scratch_operands = 0 : i64, tpu.core_type = #tpu.core_type<tc>} {
    %c0 = arith.constant 0 : index
    %c0_0 = arith.constant 0 : index
    %0 = vector.load %arg0[%c0, %c0_0] : memref<8x128xf32, #tpu.memory_space<vmem>>, vector<8x128xf32>
    %c1_i32 = arith.constant 1 : i32
    %1 = tpu.dynamic_rotate %0 by %c1_i32 dim 1 : vector<8x128xf32>, i32 -> vector<8x128xf32>
    %c0_1 = arith.constant 0 : index
    %c0_2 = arith.constant 0 : index
    %2 = vector.load %arg1[%c0_1, %c0_2] : memref<8x128xf32, #tpu.memory_space<vmem>>, vector<8x128xf32>
    tpu.vector_store %arg1[%c0_1, %c0_2], %1 {strides = array<i32>} : memref<8x128xf32, #tpu.memory_space<vmem>>, vector<8x128xf32>,
    return
  }
}

</mosaic_0001>

<llo_original>
// kernel: tpu_custom_call.1
$region0: #{tpu_custom_call.1}
  #allocation0 [shape = 'u32[]', space=smem, size = 0x4, offset = 0x4, fixed_abs, tag = 'smem constant byte address 0x4 - core index']
  #allocation1 [shape = 'u32[144,128]{1,0:T(1,128)}', space=vmem, size = 0x12000, scoped, tag = 'internal scratch']
  %s0 = inlined_call_operand.hbm [shape: f32[8,128], index: 0, kind: input, shape index: {}]
  %s1 = inlined_call_operand.hbm [shape: f32[8,128], index: 1, kind: output, shape index: {}]
  %s2 = sld [smem:[#allocation0]]
  $region18: #{tpu_custom_call.1} parent=0
    _
  %s4 = ssub.s32 1, %s2
  %s5 = scalar_select 0, %s4, %s2
  $region1: #{tpu_custom_call.1} parent=0
    #allocation2 [shape = 'u8[4096]{0}', space=vmem, size = 0x1000, scoped, tag = 'input window, operand 0, single buffered']
    #allocation3 [shape = 's32[1]{0}', space=sflag, size = 0x4, scoped, tag = 'scoped memory for tpu_custom_call.1']
    #allocation4 [shape = 's32[1]{0}', space=sflag, size = 0x4, scoped, tag = 'scoped memory for tpu_custom_call.1']
    #allocation5 [shape = 'u8[4096]{0}', space=vmem, size = 0x1000, scoped, tag = 'output window, operand 0, single buffered']
    %6 = vsyncpa [#allocation3], 0
    %7 = vsyncpa [#allocation4], 0
    // Predicated region
    $region2: #{tpu_custom_call.1} parent=1 // pred_check
      _
    $region3: #{tpu_custom_call.1} parent=1 // pred_check_branch
      %9 = sbr.rel (0) target = $region5
    $region4: #{tpu_custom_call.1} parent=1 // pred_region
      %s11 = ssub.s32 128, 128
      %12 = vsyncadd [#allocation3], %s11
      %s14 = sshll.u32 [#allocation2], 4
      %s15 = int_to_ptr.vmem [resolvable:$true] %s14
      %17 = dma.hbm_to_vmem [thread:$0]  %s0, 128, %s15, [#allocation3]
    $region5: #{tpu_custom_call.1} parent=1 // pred_fallthru
      _
    // Predicated region
    $region6: #{tpu_custom_call.1} parent=1 // pred_check
      _
    $region7: #{tpu_custom_call.1} parent=1 // pred_check_branch
      %19 = sbr.rel (0) target = $region9
    $region8: #{tpu_custom_call.1} parent=1 // pred_region
      %20 = dma.done [#allocation3], 128
    $region9: #{tpu_custom_call.1} parent=1 // pred_fallthru
      _
    %v21 = vld [vmem:[#allocation2] sm:$0xff]
    %22 = vrot.lane.b32.xlu0 %v21, 1
    %v23 = vpop.permute.xlu0 %22
    %24 = vst [vmem:[#allocation5] sm:$0xff] %v23
    // Predicated region
    $region10: #{tpu_custom_call.1} parent=1 // pred_check
      _
    $region11: #{tpu_custom_call.1} parent=1 // pred_check_branch
      %26 = sbr.rel (0) target = $region13
    $region12: #{tpu_custom_call.1} parent=1 // pred_region
      %s28 = ssub.s32 128, 128
      %29 = vsyncadd [#allocation4], %s28
      %s31 = sshll.u32 [#allocation5], 4
      %s32 = int_to_ptr.vmem [resolvable:$true] %s31
      %34 = dma.vmem_to_hbm [thread:$0]  %s32, 128, %s1, [#allocation4]
    $region13: #{tpu_custom_call.1} parent=1 // pred_fallthru
      _
    // Predicated region
    $region14: #{tpu_custom_call.1} parent=1 // pred_check
      _
    $region15: #{tpu_custom_call.1} parent=1 // pred_check_branch
      %36 = sbr.rel (0) target = $region17
    $region16: #{tpu_custom_call.1} parent=1 // pred_region
      %37 = dma.done [#allocation4], 128
    $region17: #{tpu_custom_call.1} parent=1 // pred_fallthru
      _
    %38 = vsyncpa [#allocation3], 1
    %39 = vsyncpa [#allocation4], 1

</llo_original>
